<compile_context>
chip_gen: v7x
topology: tpu7x:2x2x1
jax: 0.10.0
libtpu: 0.0.40
codegen_flags: <defaults>
</compile_context>

<pallas_src>
import functools

import jax
import jax.numpy as jnp
from jax.experimental import pallas as pl
from jax.experimental.pallas import tpu as pltpu


_MIN_TILE = 256     # never shrink the row tile below this to fit weights
_DP_CHUNK = 512     # in-kernel chunk over the (padded) adapter bottleneck dim


def _round_up(x, m):
    return (x + m - 1) // m * m


def adapter_kernel(x_ref, wdT_ref, bd_ref, wuT_ref, bu_ref, o_ref, *, dp_chunk):
    # x_ref : (tile_n, E) x.dtype    wdT_ref: (E, Dp) bf16    bd_ref: (1, Dp) f32
    # wuT_ref: (Dp, E)   bf16        bu_ref : (1, E)  f32     o_ref : (tile_n, E) out_dtype
    xb = x_ref[...].astype(jnp.bfloat16)            # cast for the MXU in-kernel (no HBM pass)
    dp = wdT_ref.shape[1]
    n_chunks = dp // dp_chunk

    def dp_block(off):
        # down_proj chunk: (tile_n, dp_chunk) in f32, bias + ReLU in f32.
        h = jnp.dot(xb, wdT_ref[:, pl.ds(off, dp_chunk)],
                    preferred_element_type=jnp.float32)
        h = jnp.maximum(h + bd_ref[:, pl.ds(off, dp_chunk)], 0.0)
        # bf16 into the second MXU pass (acceptable for adapters; keep f32 here
        # if accuracy matters more than bandwidth).
        h = h.astype(jnp.bfloat16)
        return jnp.dot(h, wuT_ref[pl.ds(off, dp_chunk), :],
                       preferred_element_type=jnp.float32)

    if n_chunks <= 1:
        acc = dp_block(0)
    else:
        def body(c, acc):
            off = pl.multiple_of(c * dp_chunk, dp_chunk)
            return acc + dp_block(off)
        acc = jax.lax.fori_loop(
            0, n_chunks, body,
            jnp.zeros((x_ref.shape[0], wuT_ref.shape[1]), jnp.float32))

    o_ref[...] = (acc + bu_ref[...]).astype(o_ref.dtype)


def _pick_tile_n(n_rows, e, dp, budget_bytes, in_itemsize, out_itemsize):
    # Resident (single-buffered) bf16 weights + f32 biases.
    weight_bytes = 2 * e * dp * 2 + 4 * (dp + e)
    # Per-row VMEM: x tile (2x buffered), out tile (2x buffered),
    # f32+bf16 h chunk and the f32 accumulator.
    dp_chunk = min(dp, _DP_CHUNK)
    per_row = 2 * in_itemsize * e + 2 * out_itemsize * e + 6 * dp_chunk + 4 * e

    avail = budget_bytes - weight_bytes
    if avail < _MIN_TILE * per_row:
        # TODO(synk): if the resident weights alone exceed the VMEM budget, tile
        # over Dp/E with an extra grid axis instead of shrinking the row tile.
        avail = _MIN_TILE * per_row
    tile = min(1024, avail // per_row)

    # Keep >= 8 grid steps (>= 4 per v7x TensorCore) once there are enough rows,
    # but never drop below _MIN_TILE rows for it.
    if n_rows >= 8 * _MIN_TILE:
        tile = min(tile, max(_MIN_TILE, _round_up(pl.cdiv(n_rows, 8), 32)))

    tile = max(32, (tile // 32) * 32)       # multiple of 32 (bf16 sublane packing)
    if n_rows < tile:                        # small problems: one clean block
        tile = _round_up(n_rows, 8)
    return int(tile)


def adapter_forward(x, w_down, b_down, w_up, b_up, *, tile_n=None, out_dtype=None):
    """x: (B, S, E).  w_down: (D, E), b_down: (D,), w_up: (E, D), b_up: (E,)
    (PyTorch nn.Linear weight conventions).  Returns (B, S, E) in `out_dtype`
    (default bf16; pass jnp.float32 to match the module's output dtype)."""
    B, S, E = x.shape
    D = w_down.shape[0]
    N = B * S
    if out_dtype is None:
        out_dtype = jnp.bfloat16            # mem-bound op: halve store traffic

    # Pad only the (tiny) weights' bottleneck dim so h is lane-dense and the
    # second matmul's K dim fills the MXU; 256-aligned once D is MXU-relevant.
    Dp = _round_up(D, 256) if D >= 128 else _round_up(D, 128)

    in_itemsize = jnp.dtype(x.dtype).itemsize
    out_itemsize = jnp.dtype(out_dtype).itemsize

    # Generation-aware VMEM budget (64 MiB/TC on v7x, 128 MiB on v5e/v6e).
    try:
        vmem_cap = int(pltpu.get_tpu_info().vmem_capacity_bytes)
    except Exception:
        vmem_cap = 64 << 20                 # conservative (v7x per-TC)
    budget = (vmem_cap * 3) // 4            # ~48 MiB v7x / ~96 MiB v5e,v6e

    if tile_n is None:
        tile_n = _pick_tile_n(N, E, Dp, budget, in_itemsize, out_itemsize)
    tile_n = _round_up(max(8, min(tile_n, _round_up(N, 8))), 8)
    grid_n = pl.cdiv(N, tile_n)             # ragged last block, no row padding

    # ---- glue (cheap, weights only; x is neither padded nor pre-cast) ----
    x2 = x.reshape(N, E)
    wdT = jnp.pad(w_down.T, ((0, 0), (0, Dp - D))).astype(jnp.bfloat16)   # (E, Dp)
    wuT = jnp.pad(w_up.T, ((0, Dp - D), (0, 0))).astype(jnp.bfloat16)     # (Dp, E)
    bd = jnp.pad(b_down, (0, Dp - D)).astype(jnp.float32).reshape(1, Dp)
    bu = b_up.astype(jnp.float32).reshape(1, E)

    dp_chunk = Dp
    if Dp % _DP_CHUNK == 0 and Dp // _DP_CHUNK >= 2:
        dp_chunk = _DP_CHUNK

    # VMEM accounting (weights single-buffered, x/out double-buffered by Pallas).
    weight_bytes = 2 * E * Dp * 2 + 4 * (Dp + E)
    tile_bytes = (2 * tile_n * E * in_itemsize + 2 * tile_n * E * out_itemsize
                  + tile_n * (6 * dp_chunk + 4 * E))
    usage = weight_bytes + tile_bytes
    vmem_limit = int(min(vmem_cap - (4 << 20), max(usage + usage // 4, 32 << 20)))

    cost = pl.CostEstimate(
        flops=4 * N * E * D,
        transcendentals=0,
        bytes_accessed=N * E * (in_itemsize + out_itemsize)
                       + 2 * E * Dp * 2 + 4 * (Dp + E))

    kernel = functools.partial(adapter_kernel, dp_chunk=dp_chunk)

    def call(weight_pipeline_mode):
        extra = ({} if weight_pipeline_mode is None
                 else {"pipeline_mode": weight_pipeline_mode})
        return pl.pallas_call(
            kernel,
            out_shape=jax.ShapeDtypeStruct((N, E), out_dtype),
            grid=(grid_n,),
            in_specs=[
                pl.BlockSpec((tile_n, E), lambda i: (i, 0)),        # x rows (pipelined)
                pl.BlockSpec((E, Dp), lambda i: (0, 0), **extra),   # W_down^T resident
                pl.BlockSpec((1, Dp), lambda i: (0, 0), **extra),   # b_down
                pl.BlockSpec((Dp, E), lambda i: (0, 0), **extra),   # W_up^T resident
                pl.BlockSpec((1, E), lambda i: (0, 0), **extra),    # b_up
            ],
            out_specs=pl.BlockSpec((tile_n, E), lambda i: (i, 0)),
            compiler_params=pltpu.CompilerParams(
                dimension_semantics=("parallel",),
                vmem_limit_bytes=vmem_limit),
            cost_estimate=cost,
        )(x2, wdT, bd, wuT, bu)

    try:
        # Single-buffer the grid-invariant weights/biases (halves their VMEM,
        # matters most under v7x's 64 MiB per-TC VMEM).
        out2 = call(pl.Buffered(1))
    except Exception:
        # Fallback for JAX versions without per-BlockSpec buffer control.
        out2 = call(None)

    return out2.reshape(B, S, E)


if __name__ == "__main__":
    # Small shapes consistent with the module: batch=2, seq=8, emb_dim=32, down_dim=16.
    B, S, E, D = 2, 8, 32, 16

    key = jax.random.PRNGKey(0)
    kx, kwd, kwu = jax.random.split(key, 3)

    x = jax.random.normal(kx, (B, S, E), dtype=jnp.float32)

    # Deterministic init mirroring init_weights(): normal(0, 0.02) weights, zero biases.
    w_down = 0.02 * jax.random.normal(kwd, (D, E), dtype=jnp.float32)  # down_proj.weight
    b_down = jnp.zeros((D,), dtype=jnp.float32)                        # down_proj.bias
    w_up = 0.02 * jax.random.normal(kwu, (E, D), dtype=jnp.float32)    # up_proj.weight
    b_up = jnp.zeros((E,), dtype=jnp.float32)                          # up_proj.bias

    out = adapter_forward(x, w_down, b_down, w_up, b_up)
    out = jax.block_until_ready(out)

    # Reference check in plain JAX (same math as the PyTorch forward).
    ref = jnp.maximum(x @ w_down.T + b_down, 0.0) @ w_up.T + b_up
    assert out.shape == (B, S, E)
    err = float(jnp.max(jnp.abs(out.astype(jnp.float32) - ref)))
    # bf16 MXU inputs + bf16 output with f32 accumulation -> loosened tolerance.
    assert jnp.allclose(out.astype(jnp.float32), ref, atol=1e-2, rtol=1e-2), err

    print("KERNEL_OK")
</pallas_src>

<mosaic_0001>
module attributes {stable_mosaic.version = 11 : i64} {
  func.func @adapter_kernel(%arg0: i32, %arg1: memref<16x32xf32, #tpu.memory_space<vmem>>, %arg2: memref<32x128xbf16, #tpu.memory_space<vmem>>, %arg3: memref<1x128xf32, #tpu.memory_space<vmem>>, %arg4: memref<128x32xbf16, #tpu.memory_space<vmem>>, %arg5: memref<1x32xf32, #tpu.memory_space<vmem>>, %arg6: memref<16x32xbf16, #tpu.memory_space<vmem>>) attributes {dimension_semantics = [#tpu.dimension_semantics<parallel>], iteration_bounds = array<i64: 1>, scalar_prefetch = 0 : i64, scratch_operands = 0 : i64, tpu.core_type = #tpu.core_type<tc>, window_params = [{transform_indices = @transform_0, window_bounds = array<i64: 16, 32>}, {pipeline_mode = #tpu.pipeline_mode<synchronous>, transform_indices = @transform_1, window_bounds = array<i64: 32, 128>}, {pipeline_mode = #tpu.pipeline_mode<synchronous>, transform_indices = @transform_2, window_bounds = array<i64: 1, 128>}, {pipeline_mode = #tpu.pipeline_mode<synchronous>, transform_indices = @transform_3, window_bounds = array<i64: 128, 32>}, {pipeline_mode = #tpu.pipeline_mode<synchronous>, transform_indices = @transform_4, window_bounds = array<i64: 1, 32>}, {transform_indices = @transform_5, window_bounds = array<i64: 16, 32>}]} {
    %c0 = arith.constant 0 : index
    %c0_0 = arith.constant 0 : index
    %0 = vector.load %arg1[%c0, %c0_0] : memref<16x32xf32, #tpu.memory_space<vmem>>, vector<16x32xf32>
    %1 = arith.truncf %0 : vector<16x32xf32> to vector<16x32xbf16>
    %c0_1 = arith.constant 0 : index
    %c0_2 = arith.constant 0 : index
    %2 = vector.load %arg2[%c0_1, %c0_2] : memref<32x128xbf16, #tpu.memory_space<vmem>>, vector<32x128xbf16>
    %cst = arith.constant dense<0.000000e+00> : vector<16x128xf32>
    %3 = tpu.matmul %1, %2, %cst {dimension_numbers = #tpu.dot_dimension_numbers<[1], [0], [0], [1], [0, 0, 1, 1], [], []>} : vector<16x32xbf16>, vector<32x128xbf16>, vector<16x128xf32> -> vector<16x128xf32>
    %c0_3 = arith.constant 0 : index
    %c0_4 = arith.constant 0 : index
    %4 = vector.load %arg3[%c0_3, %c0_4] : memref<1x128xf32, #tpu.memory_space<vmem>>, vector<1x128xf32>
    %5 = vector.broadcast %4 : vector<1x128xf32> to vector<16x128xf32>
    %6 = arith.addf %3, %5 : vector<16x128xf32>
    %cst_5 = arith.constant 0.000000e+00 : f32
    %7 = vector.broadcast %cst_5 : f32 to vector<16x128xf32>
    %8 = arith.maximumf %6, %7 : vector<16x128xf32>
    %9 = arith.truncf %8 : vector<16x128xf32> to vector<16x128xbf16>
    %c0_6 = arith.constant 0 : index
    %c0_7 = arith.constant 0 : index
    %10 = vector.load %arg4[%c0_6, %c0_7] : memref<128x32xbf16, #tpu.memory_space<vmem>>, vector<128x32xbf16>
    %cst_8 = arith.constant dense<0.000000e+00> : vector<16x32xf32>
    %11 = tpu.matmul %9, %10, %cst_8 {dimension_numbers = #tpu.dot_dimension_numbers<[1], [0], [0], [1], [0, 0, 1, 1], [], []>} : vector<16x128xbf16>, vector<128x32xbf16>, vector<16x32xf32> -> vector<16x32xf32>
    %c0_9 = arith.constant 0 : index
    %c0_10 = arith.constant 0 : index
    %12 = vector.load %arg5[%c0_9, %c0_10] : memref<1x32xf32, #tpu.memory_space<vmem>>, vector<1x32xf32>
    %13 = vector.broadcast %12 : vector<1x32xf32> to vector<16x32xf32>
    %14 = arith.addf %11, %13 : vector<16x32xf32>
    %15 = arith.truncf %14 : vector<16x32xf32> to vector<16x32xbf16>
    %c0_11 = arith.constant 0 : index
    %c0_12 = arith.constant 0 : index
    %16 = vector.load %arg6[%c0_11, %c0_12] : memref<16x32xbf16, #tpu.memory_space<vmem>>, vector<16x32xbf16>
    tpu.vector_store %arg6[%c0_11, %c0_12], %15 {strides = array<i32>} : memref<16x32xbf16, #tpu.memory_space<vmem>>, vector<16x32xbf16>,
    return
  }
  func.func @transform_0(%arg0: i32) -> (i32, i32) {
    %c0_i32 = arith.constant 0 : i32
    %c0_i32_0 = arith.constant 0 : i32
    return %arg0, %c0_i32 : i32, i32
  }
  func.func @transform_1(%arg0: i32) -> (i32, i32) {
    %c0_i32 = arith.constant 0 : i32
    %c0_i32_0 = arith.constant 0 : i32
    %c0_i32_1 = arith.constant 0 : i32
    return %c0_i32, %c0_i32_0 : i32, i32
  }
  func.func @transform_2(%arg0: i32) -> (i32, i32) {
    %c0_i32 = arith.constant 0 : i32
    %c0_i32_0 = arith.constant 0 : i32
    %c0_i32_1 = arith.constant 0 : i32
    return %c0_i32, %c0_i32_0 : i32, i32
  }
  func.func @transform_3(%arg0: i32) -> (i32, i32) {
    %c0_i32 = arith.constant 0 : i32
    %c0_i32_0 = arith.constant 0 : i32
    %c0_i32_1 = arith.constant 0 : i32
    return %c0_i32, %c0_i32_0 : i32, i32
  }
  func.func @transform_4(%arg0: i32) -> (i32, i32) {
    %c0_i32 = arith.constant 0 : i32
    %c0_i32_0 = arith.constant 0 : i32
    %c0_i32_1 = arith.constant 0 : i32
    return %c0_i32, %c0_i32_0 : i32, i32
  }
  func.func @transform_5(%arg0: i32) -> (i32, i32) {
    %c0_i32 = arith.constant 0 : i32
    %c0_i32_0 = arith.constant 0 : i32
    return %arg0, %c0_i32 : i32, i32
  }
}

module attributes {stable_mosaic.version = 11 : i64} {
  func.func @adapter_kernel(%arg0: i32, %arg1: memref<16x32xf32, #tpu.memory_space<vmem>>, %arg2: memref<32x128xbf16, #tpu.memory_space<vmem>>, %arg3: memref<1x128xf32, #tpu.memory_space<vmem>>, %arg4: memref<128x32xbf16, #tpu.memory_space<vmem>>, %arg5: memref<1x32xf32, #tpu.memory_space<vmem>>, %arg6: memref<16x32xbf16, #tpu.memory_space<vmem>>) attributes {dimension_semantics = [#tpu.dimension_semantics<parallel>], iteration_bounds = array<i64: 1>, scalar_prefetch = 0 : i64, scratch_operands = 0 : i64, tpu.core_type = #tpu.core_type<tc>, window_params = [{transform_indices = @transform_0, window_bounds = array<i64: 16, 32>}, {pipeline_mode = #tpu.pipeline_mode<synchronous>, transform_indices = @transform_1, window_bounds = array<i64: 32, 128>}, {pipeline_mode = #tpu.pipeline_mode<synchronous>, transform_indices = @transform_2, window_bounds = array<i64: 1, 128>}, {pipeline_mode = #tpu.pipeline_mode<synchronous>, transform_indices = @transform_3, window_bounds = array<i64: 128, 32>}, {pipeline_mode = #tpu.pipeline_mode<synchronous>, transform_indices = @transform_4, window_bounds = array<i64: 1, 32>}, {transform_indices = @transform_5, window_bounds = array<i64: 16, 32>}]} {
    %c0 = arith.constant 0 : index
    %c0_0 = arith.constant 0 : index
    %0 = vector.load %arg1[%c0, %c0_0] : memref<16x32xf32, #tpu.memory_space<vmem>>, vector<16x32xf32>
    %1 = arith.truncf %0 : vector<16x32xf32> to vector<16x32xbf16>
    %c0_1 = arith.constant 0 : index
    %c0_2 = arith.constant 0 : index
    %2 = vector.load %arg2[%c0_1, %c0_2] : memref<32x128xbf16, #tpu.memory_space<vmem>>, vector<32x128xbf16>
    %cst = arith.constant dense<0.000000e+00> : vector<16x128xf32>
    %3 = tpu.matmul %1, %2, %cst {dimension_numbers = #tpu.dot_dimension_numbers<[1], [0], [0], [1], [0, 0, 1, 1], [], []>} : vector<16x32xbf16>, vector<32x128xbf16>, vector<16x128xf32> -> vector<16x128xf32>
    %c0_3 = arith.constant 0 : index
    %c0_4 = arith.constant 0 : index
    %4 = vector.load %arg3[%c0_3, %c0_4] : memref<1x128xf32, #tpu.memory_space<vmem>>, vector<1x128xf32>
    %5 = vector.broadcast %4 : vector<1x128xf32> to vector<16x128xf32>
    %6 = arith.addf %3, %5 : vector<16x128xf32>
    %cst_5 = arith.constant 0.000000e+00 : f32
    %7 = vector.broadcast %cst_5 : f32 to vector<16x128xf32>
    %8 = arith.maximumf %6, %7 : vector<16x128xf32>
    %9 = arith.truncf %8 : vector<16x128xf32> to vector<16x128xbf16>
    %c0_6 = arith.constant 0 : index
    %c0_7 = arith.constant 0 : index
    %10 = vector.load %arg4[%c0_6, %c0_7] : memref<128x32xbf16, #tpu.memory_space<vmem>>, vector<128x32xbf16>
    %cst_8 = arith.constant dense<0.000000e+00> : vector<16x32xf32>
    %11 = tpu.matmul %9, %10, %cst_8 {dimension_numbers = #tpu.dot_dimension_numbers<[1], [0], [0], [1], [0, 0, 1, 1], [], []>} : vector<16x128xbf16>, vector<128x32xbf16>, vector<16x32xf32> -> vector<16x32xf32>
    %c0_9 = arith.constant 0 : index
    %c0_10 = arith.constant 0 : index
    %12 = vector.load %arg5[%c0_9, %c0_10] : memref<1x32xf32, #tpu.memory_space<vmem>>, vector<1x32xf32>
    %13 = vector.broadcast %12 : vector<1x32xf32> to vector<16x32xf32>
    %14 = arith.addf %11, %13 : vector<16x32xf32>
    %15 = arith.truncf %14 : vector<16x32xf32> to vector<16x32xbf16>
    %c0_11 = arith.constant 0 : index
    %c0_12 = arith.constant 0 : index
    %16 = vector.load %arg6[%c0_11, %c0_12] : memref<16x32xbf16, #tpu.memory_space<vmem>>, vector<16x32xbf16>
    tpu.vector_store %arg6[%c0_11, %c0_12], %15 {strides = array<i32>} : memref<16x32xbf16, #tpu.memory_space<vmem>>, vector<16x32xbf16>,
    return
  }
  func.func @transform_0(%arg0: i32) -> (i32, i32) {
    %c0_i32 = arith.constant 0 : i32
    %c0_i32_0 = arith.constant 0 : i32
    return %arg0, %c0_i32 : i32, i32
  }
  func.func @transform_1(%arg0: i32) -> (i32, i32) {
    %c0_i32 = arith.constant 0 : i32
    %c0_i32_0 = arith.constant 0 : i32
    %c0_i32_1 = arith.constant 0 : i32
    return %c0_i32, %c0_i32_0 : i32, i32
  }
  func.func @transform_2(%arg0: i32) -> (i32, i32) {
    %c0_i32 = arith.constant 0 : i32
    %c0_i32_0 = arith.constant 0 : i32
    %c0_i32_1 = arith.constant 0 : i32
    return %c0_i32, %c0_i32_0 : i32, i32
  }
  func.func @transform_3(%arg0: i32) -> (i32, i32) {
    %c0_i32 = arith.constant 0 : i32
    %c0_i32_0 = arith.constant 0 : i32
    %c0_i32_1 = arith.constant 0 : i32
    return %c0_i32, %c0_i32_0 : i32, i32
  }
  func.func @transform_4(%arg0: i32) -> (i32, i32) {
    %c0_i32 = arith.constant 0 : i32
    %c0_i32_0 = arith.constant 0 : i32
    %c0_i32_1 = arith.constant 0 : i32
    return %c0_i32, %c0_i32_0 : i32, i32
  }
  func.func @transform_5(%arg0: i32) -> (i32, i32) {
    %c0_i32 = arith.constant 0 : i32
    %c0_i32_0 = arith.constant 0 : i32
    return %arg0, %c0_i32 : i32, i32
  }
}

</mosaic_0001>

<llo_original>
// kernel: tpu_custom_call.1
$region0: #{tpu_custom_call.1}
  #allocation0 [shape = 'u32[]', space=smem, size = 0x4, offset = 0x4, fixed_abs, tag = 'smem constant byte address 0x4 - core index']
  #allocation1 [shape = 'u32[144,128]{1,0:T(1,128)}', space=vmem, size = 0x12000, scoped, tag = 'internal scratch']
  %s0 = inlined_call_operand.vmem [shape: f32[16,32], index: 0, kind: input, shape index: {}]
  %s1 = inlined_call_operand.vmem [shape: bf16[32,128], index: 1, kind: input, shape index: {}]
  %s2 = inlined_call_operand.vmem [shape: f32[1,128], index: 2, kind: input, shape index: {}]
  %s3 = inlined_call_operand.vmem [shape: bf16[128,32], index: 3, kind: input, shape index: {}]
  %s4 = inlined_call_operand.vmem [shape: f32[1,32], index: 4, kind: input, shape index: {}]
  %s5 = inlined_call_operand.hbm [shape: bf16[16,32], index: 5, kind: output, shape index: {}]
  %s6 = sld [smem:[#allocation0]]
  $region30: #{tpu_custom_call.1} parent=0
    _
  %s8 = ssub.s32 1, %s6
  %s9 = scalar_select 0, %s8, %s6
  $region1: #{tpu_custom_call.1} parent=0
    #allocation2 [shape = 'u8[4096]{0}', space=vmem, size = 0x1000, scoped, tag = 'output window, operand 0, single buffered']
    #allocation3 [shape = 's32[1]{0}', space=sflag, size = 0x4, scoped, tag = 'scoped memory for tpu_custom_call.1']
    %10 = vsyncpa [#allocation3], 0
    // Predicated region
    $region2: #{tpu_custom_call.1} parent=1 // pred_check
      _
    $region3: #{tpu_custom_call.1} parent=1 // pred_check_branch
      %12 = sbr.rel (0) target = $region5
    $region4: #{tpu_custom_call.1} parent=1 // pred_region
      _
    $region5: #{tpu_custom_call.1} parent=1 // pred_fallthru
      _
    // Predicated region
    $region6: #{tpu_custom_call.1} parent=1 // pred_check
      _
    $region7: #{tpu_custom_call.1} parent=1 // pred_check_branch
      %14 = sbr.rel (0) target = $region9
    $region8: #{tpu_custom_call.1} parent=1 // pred_region
      _
    $region9: #{tpu_custom_call.1} parent=1 // pred_fallthru
      _
    // Predicated region
    $region10: #{tpu_custom_call.1} parent=1 // pred_check
      _
    $region11: #{tpu_custom_call.1} parent=1 // pred_check_branch
      %16 = sbr.rel (0) target = $region13
    $region12: #{tpu_custom_call.1} parent=1 // pred_region
      _
    $region13: #{tpu_custom_call.1} parent=1 // pred_fallthru
      _
    // Predicated region
    $region14: #{tpu_custom_call.1} parent=1 // pred_check
      _
    $region15: #{tpu_custom_call.1} parent=1 // pred_check_branch
      %18 = sbr.rel (0) target = $region17
    $region16: #{tpu_custom_call.1} parent=1 // pred_region
      _
    $region17: #{tpu_custom_call.1} parent=1 // pred_fallthru
      _
    // Predicated region
    $region18: #{tpu_custom_call.1} parent=1 // pred_check
      _
    $region19: #{tpu_custom_call.1} parent=1 // pred_check_branch
      %20 = sbr.rel (0) target = $region21
    $region20: #{tpu_custom_call.1} parent=1 // pred_region
      _
    $region21: #{tpu_custom_call.1} parent=1 // pred_fallthru
      _
    %v22 = vld [vmem:[%s0] sm:$0xff]
    %v23 = vld [vmem:[%s0 + $0x8] sm:$0xff]
    %v24 = vpack.c.bf16 %v23, %v22
    %v25 = vld [vmem:[%s1] sm:$0xf]
    %v26 = vld [vmem:[%s1 + $0x4] sm:$0xf]
    %v27 = vld [vmem:[%s1 + $0x8] sm:$0xf]
    %v28 = vld [vmem:[%s1 + $0xc] sm:$0xf]
    %v29 = vld [vmem:[%s2] sm:$0x1]
    %v31 = vlaneseq
    %v32 = vshrl.u32 %v31, 7
    %v33 = vsub.s32 0, %v32
    %v34 = vrot.slane %v29, %v33
    %v40 = vunpack.c.l.b16 %v25
    %v41 = vunpack.c.l.b16 %v26
    %v42 = vunpack.c.l.b16 %v27
    %v43 = vunpack.c.l.b16 %v28
    %v44 = vpack.c.b16 %v41, %v40
    %v45 = vpack.c.b16 %v43, %v42
    %vm48 = vcmask 261120
    %v50 = vsel %vm48, %v24, 0
    %52 = vmatprep.subr.bf16.mxu0 0
    %53 = vmatpush1.bf16.msra.mxu0 %v44
    %54 = vmatprep.subr.bf16.mxu0 0
    %55 = vmatpush1.bf16.msra.mxu0 %v45
    %56 = vmatprep.subr.bf16.mxu0 0
    %57 = vmatpush1.bf16.msra.mxu0 0
    %58 = vmatprep.subr.bf16.mxu0 0
    %59 = vmatpush1.bf16.msra.mxu0 0
    %60 = vmatprep.subr.bf16.mxu0 0
    %61 = vmatpush1.bf16.msra.mxu0 0
    %62 = vmatprep.subr.bf16.mxu0 0
    %63 = vmatpush1.bf16.msra.mxu0 0
    %64 = vmatprep.subr.bf16.mxu0 0
    %65 = vmatpush1.bf16.msra.mxu0 0
    %66 = vmatprep.subr.bf16.mxu0 0
    %67 = vmatpush1.bf16.msra.mxu0 0
    %68 = vmatprep.subr.bf16.mxu0 0
    %69 = vmatpush1.bf16.msra.mxu0 0
    %70 = vmatprep.subr.bf16.mxu0 0
    %71 = vmatpush1.bf16.msra.mxu0 0
    %72 = vmatprep.subr.bf16.mxu0 0
    %73 = vmatpush1.bf16.msra.mxu0 0
    %74 = vmatprep.subr.bf16.mxu0 0
    %75 = vmatpush1.bf16.msra.mxu0 0
    %76 = vmatprep.subr.bf16.mxu0 0
    %77 = vmatpush1.bf16.msra.mxu0 0
    %78 = vmatprep.subr.bf16.mxu0 0
    %79 = vmatpush1.bf16.msra.mxu0 0
    %80 = vmatprep.subr.bf16.mxu0 0
    %81 = vmatpush1.bf16.msra.mxu0 0
    %82 = vmatprep.subr.bf16.mxu0 0
    %83 = vmatpush1.bf16.msra.mxu0 0
    %84 = vmatprep.mubr.bf16.mxu0 0
    %85 = vmatmul.mubr.bf16.gmra.mrb[0].mxu0 %v50
    %v86 = vpop.f32.mrb[0].mxu0
    %v87 = vadd.f32 %v34, %v86
    %v88 = vpop.f32.mrb[0].mxu0
    %v89 = vpop.f32.mrb[0].mxu0
    %v90 = vadd.f32 %v34, %v89
    %v91 = vpop.f32.mrb[0].mxu0
    %92 = vdwg.mxu0
    %v93 = vmax.f32 %v87, 0.0
    %v94 = vmax.f32 %v90, 0.0
    %v95 = vpack.c.bf16 %v94, %v93
    %v96 = vld [vmem:[%s3] sm:$0xf]
    %v97 = vld [vmem:[%s3 + $0x4] sm:$0xf]
    %v98 = vld [vmem:[%s3 + $0x8] sm:$0xf]
    %v99 = vld [vmem:[%s3 + $0xc] sm:$0xf]
    %v100 = vld [vmem:[%s3 + $0x10] sm:$0xf]
    %v101 = vld [vmem:[%s3 + $0x14] sm:$0xf]
    %v102 = vld [vmem:[%s3 + $0x18] sm:$0xf]
    %v103 = vld [vmem:[%s3 + $0x1c] sm:$0xf]
    %v104 = vld [vmem:[%s3 + $0x20] sm:$0xf]
    %v105 = vld [vmem:[%s3 + $0x24] sm:$0xf]
    %v106 = vld [vmem:[%s3 + $0x28] sm:$0xf]
    %v107 = vld [vmem:[%s3 + $0x2c] sm:$0xf]
    %v108 = vld [vmem:[%s3 + $0x30] sm:$0xf]
    %v109 = vld [vmem:[%s3 + $0x34] sm:$0xf]
    %v110 = vld [vmem:[%s3 + $0x38] sm:$0xf]
    %v111 = vld [vmem:[%s3 + $0x3c] sm:$0xf]
    %v112 = vld [vmem:[%s4] sm:$0x1]
    %v114 = vlaneseq
    %v115 = vshrl.u32 %v114, 7
    %v116 = vsub.s32 0, %v115
    %v117 = vrot.slane %v112, %v116
    %v135 = vunpack.c.l.b16 %v96
    %v136 = vunpack.c.l.b16 %v97
    %v137 = vunpack.c.l.b16 %v98
    %v138 = vunpack.c.l.b16 %v99
    %v139 = vunpack.c.l.b16 %v100
    %v140 = vunpack.c.l.b16 %v101
    %v141 = vunpack.c.l.b16 %v102
    %v142 = vunpack.c.l.b16 %v103
    %v143 = vunpack.c.l.b16 %v104
    %v144 = vunpack.c.l.b16 %v105
    %v145 = vunpack.c.l.b16 %v106
    %v146 = vunpack.c.l.b16 %v107
    %v147 = vunpack.c.l.b16 %v108
    %v148 = vunpack.c.l.b16 %v109
    %v149 = vunpack.c.l.b16 %v110
    %v150 = vunpack.c.l.b16 %v111
    %v151 = vpack.c.b16 %v136, %v135
    %v152 = vpack.c.b16 %v138, %v137
    %v153 = vpack.c.b16 %v140, %v139
    %v154 = vpack.c.b16 %v142, %v141
    %v155 = vpack.c.b16 %v144, %v143
    %v156 = vpack.c.b16 %v146, %v145
    %v157 = vpack.c.b16 %v148, %v147
    %v158 = vpack.c.b16 %v150, %v149
    %167 = vmatprep.subr.bf16.mxu0 0
    %168 = vmatpush1.bf16.msra.mxu0 %v151
    %169 = vmatprep.subr.bf16.mxu0 0
    %170 = vmatpush1.bf16.msra.mxu0 %v152
    %171 = vmatprep.subr.bf16.mxu0 0
    %172 = vmatpush1.bf16.msra.mxu0 %v153
    %173 = vmatprep.subr.bf16.mxu0 0
    %174 = vmatpush1.bf16.msra.mxu0 %v154
    %175 = vmatprep.subr.bf16.mxu0 0
    %176 = vmatpush1.bf16.msra.mxu0 %v155
    %177 = vmatprep.subr.bf16.mxu0 0
    %178 = vmatpush1.bf16.msra.mxu0 %v156
    %179 = vmatprep.subr.bf16.mxu0 0
    %180 = vmatpush1.bf16.msra.mxu0 %v157
    %181 = vmatprep.subr.bf16.mxu0 0
    %182 = vmatpush1.bf16.msra.mxu0 %v158
    %183 = vmatprep.subr.bf16.mxu0 0
    %184 = vmatpush1.bf16.msra.mxu0 0
    %185 = vmatprep.subr.bf16.mxu0 0
    %186 = vmatpush1.bf16.msra.mxu0 0
    %187 = vmatprep.subr.bf16.mxu0 0
    %188 = vmatpush1.bf16.msra.mxu0 0
    %189 = vmatprep.subr.bf16.mxu0 0
    %190 = vmatpush1.bf16.msra.mxu0 0
    %191 = vmatprep.subr.bf16.mxu0 0
    %192 = vmatpush1.bf16.msra.mxu0 0
    %193 = vmatprep.subr.bf16.mxu0 0
    %194 = vmatpush1.bf16.msra.mxu0 0
    %195 = vmatprep.subr.bf16.mxu0 0
    %196 = vmatpush1.bf16.msra.mxu0 0
    %197 = vmatprep.subr.bf16.mxu0 0
    %198 = vmatpush1.bf16.msra.mxu0 0
    %199 = vmatprep.mubr.bf16.mxu0 0
    %200 = vmatmul.mubr.bf16.gmra.mrb[0].mxu0 %v95
    %v201 = vpop.f32.mrb[0].mxu0
    %v202 = vadd.f32 %v117, %v201
    %v203 = vpop.f32.mrb[0].mxu0
    %v204 = vpop.f32.mrb[0].mxu0
    %v205 = vadd.f32 %v117, %v204
    %v206 = vpop.f32.mrb[0].mxu0
    %207 = vdwg.mxu0
    %v208 = vpack.c.bf16 %v205, %v202
    %v210 = vunpack.c.l.b16 %v208
    %v211 = vunpack.c.h.b16 %v208
    %v212 = vpack.c.b16 %v210, %v210
    %v213 = vpack.c.b16 %v211, %v211
    %vm216 = vcmask 257024
    %217 = vst.msk [vmem:[#allocation2] sm:$0xf] %vm216, %v212
    %218 = vst.msk [vmem:[#allocation2 + $0x4] sm:$0xf] %vm216, %v213
    // Predicated region
    $region22: #{tpu_custom_call.1} parent=1 // pred_check
      _
    $region23: #{tpu_custom_call.1} parent=1 // pred_check_branch
      %220 = sbr.rel (0) target = $region25
    $region24: #{tpu_custom_call.1} parent=1 // pred_region
      %s222 = ssub.s32 128, 128
      %223 = vsyncadd [#allocation3], %s222
      %s224 = sshll.u32 [#allocation2], 4
      %s225 = int_to_ptr.vmem [resolvable:$true] %s224
      %230 = dma.vmem_to_hbm [thread:$0]  %s225, 128, %s5, [#allocation3], 64, 64, 4
    $region25: #{tpu_custom_call.1} parent=1 // pred_fallthru
      _
    // Predicated region
    $region26: #{tpu_custom_call.1} parent=1 // pred_check
      _
    $region27: #{tpu_custom_call.1} parent=1 // pred_check_branch
      %232 = sbr.rel (0) target = $region29
    $region28: #{tpu_custom_call.1} parent=1 // pred_region
      %233 = dma.done [#allocation3], 128
    $region29: #{tpu_custom_call.1} parent=1 // pred_fallthru
      _
    %234 = vsyncpa [#allocation3], 1

// kernel: tpu_custom_call.1
$region0: #{tpu_custom_call.1}
  #allocation0 [shape = 'u32[]', space=smem, size = 0x4, offset = 0x4, fixed_abs, tag = 'smem constant byte address 0x4 - core index']
  #allocation1 [shape = 'u32[144,128]{1,0:T(1,128)}', space=vmem, size = 0x12000, scoped, tag = 'internal scratch']
  %s0 = inlined_call_operand.vmem [shape: f32[16,32], index: 0, kind: input, shape index: {}]
  %s1 = inlined_call_operand.vmem [shape: bf16[32,128], index: 1, kind: input, shape index: {}]
  %s2 = inlined_call_operand.vmem [shape: f32[1,128], index: 2, kind: input, shape index: {}]
  %s3 = inlined_call_operand.vmem [shape: bf16[128,32], index: 3, kind: input, shape index: {}]
  %s4 = inlined_call_operand.vmem [shape: f32[1,32], index: 4, kind: input, shape index: {}]
  %s5 = inlined_call_operand.hbm [shape: bf16[16,32], index: 5, kind: output, shape index: {}]
  %s6 = sld [smem:[#allocation0]]
  $region30: #{tpu_custom_call.1} parent=0
    _
  %s8 = ssub.s32 1, %s6
  %s9 = scalar_select 0, %s8, %s6
  $region1: #{tpu_custom_call.1} parent=0
    #allocation2 [shape = 'u8[4096]{0}', space=vmem, size = 0x1000, scoped, tag = 'output window, operand 0, single buffered']
    #allocation3 [shape = 's32[1]{0}', space=sflag, size = 0x4, scoped, tag = 'scoped memory for tpu_custom_call.1']
    %10 = vsyncpa [#allocation3], 0
    // Predicated region
    $region2: #{tpu_custom_call.1} parent=1 // pred_check
      _
    $region3: #{tpu_custom_call.1} parent=1 // pred_check_branch
      %12 = sbr.rel (0) target = $region5
    $region4: #{tpu_custom_call.1} parent=1 // pred_region
      _
    $region5: #{tpu_custom_call.1} parent=1 // pred_fallthru
      _
    // Predicated region
    $region6: #{tpu_custom_call.1} parent=1 // pred_check
      _
    $region7: #{tpu_custom_call.1} parent=1 // pred_check_branch
      %14 = sbr.rel (0) target = $region9
    $region8: #{tpu_custom_call.1} parent=1 // pred_region
      _
    $region9: #{tpu_custom_call.1} parent=1 // pred_fallthru
      _
    // Predicated region
    $region10: #{tpu_custom_call.1} parent=1 // pred_check
      _
    $region11: #{tpu_custom_call.1} parent=1 // pred_check_branch
      %16 = sbr.rel (0) target = $region13
    $region12: #{tpu_custom_call.1} parent=1 // pred_region
      _
    $region13: #{tpu_custom_call.1} parent=1 // pred_fallthru
      _
    // Predicated region
    $region14: #{tpu_custom_call.1} parent=1 // pred_check
      _
    $region15: #{tpu_custom_call.1} parent=1 // pred_check_branch
      %18 = sbr.rel (0) target = $region17
    $region16: #{tpu_custom_call.1} parent=1 // pred_region
      _
    $region17: #{tpu_custom_call.1} parent=1 // pred_fallthru
      _
    // Predicated region
    $region18: #{tpu_custom_call.1} parent=1 // pred_check
      _
    $region19: #{tpu_custom_call.1} parent=1 // pred_check_branch
      %20 = sbr.rel (0) target = $region21
    $region20: #{tpu_custom_call.1} parent=1 // pred_region
      _
    $region21: #{tpu_custom_call.1} parent=1 // pred_fallthru
      _
    %v22 = vld [vmem:[%s0] sm:$0xff]
    %v23 = vld [vmem:[%s0 + $0x8] sm:$0xff]
    %v24 = vpack.c.bf16 %v23, %v22
    %v25 = vld [vmem:[%s1] sm:$0xf]
    %v26 = vld [vmem:[%s1 + $0x4] sm:$0xf]
    %v27 = vld [vmem:[%s1 + $0x8] sm:$0xf]
    %v28 = vld [vmem:[%s1 + $0xc] sm:$0xf]
    %v29 = vld [vmem:[%s2] sm:$0x1]
    %v31 = vlaneseq
    %v32 = vshrl.u32 %v31, 7
    %v33 = vsub.s32 0, %v32
    %v34 = vrot.slane %v29, %v33
    %v40 = vunpack.c.l.b16 %v25
    %v41 = vunpack.c.l.b16 %v26
    %v42 = vunpack.c.l.b16 %v27
    %v43 = vunpack.c.l.b16 %v28
    %v44 = vpack.c.b16 %v41, %v40
    %v45 = vpack.c.b16 %v43, %v42
    %vm48 = vcmask 261120
    %v50 = vsel %vm48, %v24, 0
    %52 = vmatprep.subr.bf16.mxu0 0
    %53 = vmatpush1.bf16.msra.mxu0 %v44
    %54 = vmatprep.subr.bf16.mxu0 0
    %55 = vmatpush1.bf16.msra.mxu0 %v45
    %56 = vmatprep.subr.bf16.mxu0 0
    %57 = vmatpush1.bf16.msra.mxu0 0
    %58 = vmatprep.subr.bf16.mxu0 0
    %59 = vmatpush1.bf16.msra.mxu0 0
    %60 = vmatprep.subr.bf16.mxu0 0
    %61 = vmatpush1.bf16.msra.mxu0 0
    %62 = vmatprep.subr.bf16.mxu0 0
    %63 = vmatpush1.bf16.msra.mxu0 0
    %64 = vmatprep.subr.bf16.mxu0 0
    %65 = vmatpush1.bf16.msra.mxu0 0
    %66 = vmatprep.subr.bf16.mxu0 0
    %67 = vmatpush1.bf16.msra.mxu0 0
    %68 = vmatprep.subr.bf16.mxu0 0
    %69 = vmatpush1.bf16.msra.mxu0 0
    %70 = vmatprep.subr.bf16.mxu0 0
    %71 = vmatpush1.bf16.msra.mxu0 0
    %72 = vmatprep.subr.bf16.mxu0 0
    %73 = vmatpush1.bf16.msra.mxu0 0
    %74 = vmatprep.subr.bf16.mxu0 0
    %75 = vmatpush1.bf16.msra.mxu0 0
    %76 = vmatprep.subr.bf16.mxu0 0
    %77 = vmatpush1.bf16.msra.mxu0 0
    %78 = vmatprep.subr.bf16.mxu0 0
    %79 = vmatpush1.bf16.msra.mxu0 0
    %80 = vmatprep.subr.bf16.mxu0 0
    %81 = vmatpush1.bf16.msra.mxu0 0
    %82 = vmatprep.subr.bf16.mxu0 0
    %83 = vmatpush1.bf16.msra.mxu0 0
    %84 = vmatprep.mubr.bf16.mxu0 0
    %85 = vmatmul.mubr.bf16.gmra.mrb[0].mxu0 %v50
    %v86 = vpop.f32.mrb[0].mxu0
    %v87 = vadd.f32 %v34, %v86
    %v88 = vpop.f32.mrb[0].mxu0
    %v89 = vpop.f32.mrb[0].mxu0
    %v90 = vadd.f32 %v34, %v89
    %v91 = vpop.f32.mrb[0].mxu0
    %92 = vdwg.mxu0
    %v93 = vmax.f32 %v87, 0.0
    %v94 = vmax.f32 %v90, 0.0
    %v95 = vpack.c.bf16 %v94, %v93
    %v96 = vld [vmem:[%s3] sm:$0xf]
    %v97 = vld [vmem:[%s3 + $0x4] sm:$0xf]
    %v98 = vld [vmem:[%s3 + $0x8] sm:$0xf]
    %v99 = vld [vmem:[%s3 + $0xc] sm:$0xf]
    %v100 = vld [vmem:[%s3 + $0x10] sm:$0xf]
    %v101 = vld [vmem:[%s3 + $0x14] sm:$0xf]
    %v102 = vld [vmem:[%s3 + $0x18] sm:$0xf]
    %v103 = vld [vmem:[%s3 + $0x1c] sm:$0xf]
    %v104 = vld [vmem:[%s3 + $0x20] sm:$0xf]
    %v105 = vld [vmem:[%s3 + $0x24] sm:$0xf]
    %v106 = vld [vmem:[%s3 + $0x28] sm:$0xf]
    %v107 = vld [vmem:[%s3 + $0x2c] sm:$0xf]
    %v108 = vld [vmem:[%s3 + $0x30] sm:$0xf]
    %v109 = vld [vmem:[%s3 + $0x34] sm:$0xf]
    %v110 = vld [vmem:[%s3 + $0x38] sm:$0xf]
    %v111 = vld [vmem:[%s3 + $0x3c] sm:$0xf]
    %v112 = vld [vmem:[%s4] sm:$0x1]
    %v114 = vlaneseq
    %v115 = vshrl.u32 %v114, 7
    %v116 = vsub.s32 0, %v115
    %v117 = vrot.slane %v112, %v116
    %v135 = vunpack.c.l.b16 %v96
    %v136 = vunpack.c.l.b16 %v97
    %v137 = vunpack.c.l.b16 %v98
    %v138 = vunpack.c.l.b16 %v99
    %v139 = vunpack.c.l.b16 %v100
    %v140 = vunpack.c.l.b16 %v101
    %v141 = vunpack.c.l.b16 %v102
    %v142 = vunpack.c.l.b16 %v103
    %v143 = vunpack.c.l.b16 %v104
    %v144 = vunpack.c.l.b16 %v105
    %v145 = vunpack.c.l.b16 %v106
    %v146 = vunpack.c.l.b16 %v107
    %v147 = vunpack.c.l.b16 %v108
    %v148 = vunpack.c.l.b16 %v109
    %v149 = vunpack.c.l.b16 %v110
    %v150 = vunpack.c.l.b16 %v111
    %v151 = vpack.c.b16 %v136, %v135
    %v152 = vpack.c.b16 %v138, %v137
    %v153 = vpack.c.b16 %v140, %v139
    %v154 = vpack.c.b16 %v142, %v141
    %v155 = vpack.c.b16 %v144, %v143
    %v156 = vpack.c.b16 %v146, %v145
    %v157 = vpack.c.b16 %v148, %v147
    %v158 = vpack.c.b16 %v150, %v149
    %167 = vmatprep.subr.bf16.mxu0 0
    %168 = vmatpush1.bf16.msra.mxu0 %v151
    %169 = vmatprep.subr.bf16.mxu0 0
    %170 = vmatpush1.bf16.msra.mxu0 %v152
    %171 = vmatprep.subr.bf16.mxu0 0
    %172 = vmatpush1.bf16.msra.mxu0 %v153
    %173 = vmatprep.subr.bf16.mxu0 0
    %174 = vmatpush1.bf16.msra.mxu0 %v154
    %175 = vmatprep.subr.bf16.mxu0 0
    %176 = vmatpush1.bf16.msra.mxu0 %v155
    %177 = vmatprep.subr.bf16.mxu0 0
    %178 = vmatpush1.bf16.msra.mxu0 %v156
    %179 = vmatprep.subr.bf16.mxu0 0
    %180 = vmatpush1.bf16.msra.mxu0 %v157
    %181 = vmatprep.subr.bf16.mxu0 0
    %182 = vmatpush1.bf16.msra.mxu0 %v158
    %183 = vmatprep.subr.bf16.mxu0 0
    %184 = vmatpush1.bf16.msra.mxu0 0
    %185 = vmatprep.subr.bf16.mxu0 0
    %186 = vmatpush1.bf16.msra.mxu0 0
    %187 = vmatprep.subr.bf16.mxu0 0
    %188 = vmatpush1.bf16.msra.mxu0 0
    %189 = vmatprep.subr.bf16.mxu0 0
    %190 = vmatpush1.bf16.msra.mxu0 0
    %191 = vmatprep.subr.bf16.mxu0 0
    %192 = vmatpush1.bf16.msra.mxu0 0
    %193 = vmatprep.subr.bf16.mxu0 0
    %194 = vmatpush1.bf16.msra.mxu0 0
    %195 = vmatprep.subr.bf16.mxu0 0
    %196 = vmatpush1.bf16.msra.mxu0 0
    %197 = vmatprep.subr.bf16.mxu0 0
    %198 = vmatpush1.bf16.msra.mxu0 0
    %199 = vmatprep.mubr.bf16.mxu0 0
    %200 = vmatmul.mubr.bf16.gmra.mrb[0].mxu0 %v95
    %v201 = vpop.f32.mrb[0].mxu0
    %v202 = vadd.f32 %v117, %v201
    %v203 = vpop.f32.mrb[0].mxu0
    %v204 = vpop.f32.mrb[0].mxu0
    %v205 = vadd.f32 %v117, %v204
    %v206 = vpop.f32.mrb[0].mxu0
    %207 = vdwg.mxu0
    %v208 = vpack.c.bf16 %v205, %v202
    %v210 = vunpack.c.l.b16 %v208
    %v211 = vunpack.c.h.b16 %v208
    %v212 = vpack.c.b16 %v210, %v210
    %v213 = vpack.c.b16 %v211, %v211
    %vm216 = vcmask 257024
    %217 = vst.msk [vmem:[#allocation2] sm:$0xf] %vm216, %v212
    %218 = vst.msk [vmem:[#allocation2 + $0x4] sm:$0xf] %vm216, %v213
    // Predicated region
    $region22: #{tpu_custom_call.1} parent=1 // pred_check
      _
    $region23: #{tpu_custom_call.1} parent=1 // pred_check_branch
      %220 = sbr.rel (0) target = $region25
    $region24: #{tpu_custom_call.1} parent=1 // pred_region
      %s222 = ssub.s32 128, 128
      %223 = vsyncadd [#allocation3], %s222
      %s224 = sshll.u32 [#allocation2], 4
      %s225 = int_to_ptr.vmem [resolvable:$true] %s224
      %230 = dma.vmem_to_hbm [thread:$0]  %s225, 128, %s5, [#allocation3], 64, 64, 4
    $region25: #{tpu_custom_call.1} parent=1 // pred_fallthru
      _
    // Predicated region
    $region26: #{tpu_custom_call.1} parent=1 // pred_check
      _
    $region27: #{tpu_custom_call.1} parent=1 // pred_check_branch
      %232 = sbr.rel (0) target = $region29
    $region28: #{tpu_custom_call.1} parent=1 // pred_region
      %233 = dma.done [#allocation3], 128
    $region29: #{tpu_custom_call.1} parent=1 // pred_fallthru
      _
    %234 = vsyncpa [#allocation3], 1

</llo_original>
